<compile_context>
chip_gen: v7x
topology: tpu7x:2x2x1
jax: 0.10.0
libtpu: 0.0.40
codegen_flags: <defaults>
</compile_context>

<pallas_src>
import jax
import jax.numpy as jnp
import numpy as np
from jax.experimental import pallas as pl
from jax.experimental.pallas import tpu as pltpu

LANE = 128
NSEG = 13   # number of 128-lane weight segments in the packed slab


def attn_decoder_kernel(x_ref, h_ref, enc_ref, w_ref, b_ref, out_ref):
    """Single decoder step.  All weights/biases arrive in two packed slabs.

    Segment map (each 128 lanes wide, K = H rows of the weight slab):
      0      : embedding              (LHS = x, zero-padded to width H)
      1      : attn[:, :H]            (LHS = emb)          -> logits1 part
      2      : attn_combine[:, :H]    (LHS = emb)          -> weighted_input part
      3      : attn2[:, :H]           (LHS = emb)          -> logits2 part
      4      : attn[:, H:]            (LHS = h)            -> logits1 part
      5..7   : gru.w_hh gates r,z,n   (LHS = h)
      8      : attn_combine[:, H:]    (LHS = attn_applied)
      9      : attn2[:, H:]           (LHS = enc[:, -1])
      10..12 : gru.w_ih gates r,z,n   (LHS = weighted_input)
    Biases are packed at the same column offsets (zeros where not applicable).
    """
    B, H = h_ref.shape
    S = enc_ref.shape[1]
    L = LANE

    x = x_ref[...]          # (B, H)   zero-padded input features
    h = h_ref[...]          # (B, H)
    enc = enc_ref[...]      # (B, S, H)

    def mm(lhs, seg0, nseg):
        lo, hi = seg0 * L, (seg0 + nseg) * L
        return (jnp.dot(lhs, w_ref[:, lo:hi], preferred_element_type=jnp.float32)
                + b_ref[:, lo:hi])

    # embedded = relu(embedding(input)); dropout == identity (eval mode)
    emb = jnp.maximum(mm(x, 0, 1)[:, :H], 0.0)                     # (B, H)

    # fused shared-LHS matmuls (segments are 128-lane aligned -> free slices)
    emb_res = mm(emb, 1, 3)                                        # (B, 3*128)
    h_res = mm(h, 4, 4)                                            # (B, 4*128)

    # attn1_weights = softmax(attn(cat(emb, hidden)), dim=1)
    logits1 = emb_res[:, :S] + h_res[:, :S]
    logits1 = logits1 - jnp.max(logits1, axis=-1, keepdims=True)
    e1 = jnp.exp(logits1)
    attn1 = e1 * pl.reciprocal(jnp.sum(e1, axis=-1, keepdims=True), approx=True)

    # attn_applied = bmm(attn1[:,None,:], encoder_outputs)  (VPU mul + sublane reduce)
    attn_applied = jnp.sum(attn1[:, :, None] * enc, axis=1)        # (B, H)

    # weighted_input = relu(attn_combine(cat(emb, attn_applied)))
    wi = jnp.maximum(emb_res[:, L:L + H] + mm(attn_applied, 8, 1)[:, :H], 0.0)

    # single-timestep GRU (PyTorch gate order r, z, n); gates live in separate
    # 128-lane segments so all slices below are lane-aligned views.
    gi = mm(wi, 10, 3)                                             # (B, 3*128)
    i_r, i_z, i_n = gi[:, 0:H], gi[:, L:L + H], gi[:, 2 * L:2 * L + H]
    h_r = h_res[:, L:L + H]
    h_z = h_res[:, 2 * L:2 * L + H]
    h_n = h_res[:, 3 * L:3 * L + H]
    r = jax.nn.sigmoid(i_r + h_r)
    z = jax.nn.sigmoid(i_z + h_z)
    n = jnp.tanh(i_n + r * h_n)
    h_new = (1.0 - z) * n + z * h                                  # (B, H)

    # attn2_weights = softmax(attn2(cat(emb, encoder_outputs[:, -1, :])), dim=1)
    enc_last = enc[:, S - 1, :]                                    # (B, H)
    logits2 = emb_res[:, 2 * L:2 * L + H] + mm(enc_last, 9, 1)[:, :H]
    logits2 = logits2 - jnp.max(logits2, axis=-1, keepdims=True)
    e2 = jnp.exp(logits2)
    attn2 = e2 * pl.reciprocal(jnp.sum(e2, axis=-1, keepdims=True), approx=True)

    # output = bmm(gru_out (B,1,H), attn2 (B,H,1)).squeeze()  -> (B,)
    out = jnp.sum(h_new * attn2, axis=-1, keepdims=True)           # (B, 1)

    # single lane-dense output slab: four aligned, unmasked (B,128) column stores
    def pad_l(a):
        w = a.shape[-1]
        if w == L:
            return a
        return jnp.concatenate([a, jnp.zeros((B, L - w), jnp.float32)], axis=-1)

    out_ref[:, 0 * L:1 * L] = pad_l(out)
    out_ref[:, 1 * L:2 * L] = pad_l(h_new)
    out_ref[:, 2 * L:3 * L] = pad_l(attn1)
    out_ref[:, 3 * L:4 * L] = pad_l(attn2)


def init_params(key, input_size, hidden_size, seq_length):
    ks = jax.random.split(key, 14)
    s = 0.1
    # PyTorch layouts: Linear W (out_features, in_features), b (out_features,)
    #                  GRU weight_ih/hh (3H, H), bias (3H,), gate order r,z,n
    return {
        "w_emb": jax.random.normal(ks[0], (hidden_size, input_size), jnp.float32) * s,
        "b_emb": jax.random.normal(ks[1], (hidden_size,), jnp.float32) * s,
        "w_attn": jax.random.normal(ks[2], (seq_length, 2 * hidden_size), jnp.float32) * s,
        "b_attn": jax.random.normal(ks[3], (seq_length,), jnp.float32) * s,
        "w_comb": jax.random.normal(ks[4], (hidden_size, 2 * hidden_size), jnp.float32) * s,
        "b_comb": jax.random.normal(ks[5], (hidden_size,), jnp.float32) * s,
        "w_ih": jax.random.normal(ks[6], (3 * hidden_size, hidden_size), jnp.float32) * s,
        "b_ih": jax.random.normal(ks[7], (3 * hidden_size,), jnp.float32) * s,
        "w_hh": jax.random.normal(ks[8], (3 * hidden_size, hidden_size), jnp.float32) * s,
        "b_hh": jax.random.normal(ks[9], (3 * hidden_size,), jnp.float32) * s,
        "w_attn2": jax.random.normal(ks[10], (hidden_size, 2 * hidden_size), jnp.float32) * s,
        "b_attn2": jax.random.normal(ks[11], (hidden_size,), jnp.float32) * s,
    }


def _pack_params(params, H, S):
    """Pack all weights/biases into two lane-dense slabs (see kernel docstring)."""
    L = LANE
    w = jnp.zeros((H, NSEG * L), jnp.float32)
    b = jnp.zeros((1, NSEG * L), jnp.float32)

    def put_w(slab, seg, mat):
        r, c = mat.shape
        return slab.at[:r, seg * L:seg * L + c].set(mat.astype(jnp.float32))

    def put_b(slab, seg, vec):
        return slab.at[0, seg * L:seg * L + vec.shape[0]].set(vec.astype(jnp.float32))

    w = put_w(w, 0, params["w_emb"].T)                  # (In, H), rows In:H stay zero
    w = put_w(w, 1, params["w_attn"][:, :H].T)          # (H, S)
    w = put_w(w, 2, params["w_comb"][:, :H].T)          # (H, H)
    w = put_w(w, 3, params["w_attn2"][:, :H].T)         # (H, H)
    w = put_w(w, 4, params["w_attn"][:, H:].T)          # (H, S)
    w = put_w(w, 5, params["w_hh"][0:H, :].T)           # gate r
    w = put_w(w, 6, params["w_hh"][H:2 * H, :].T)       # gate z
    w = put_w(w, 7, params["w_hh"][2 * H:3 * H, :].T)   # gate n
    w = put_w(w, 8, params["w_comb"][:, H:].T)
    w = put_w(w, 9, params["w_attn2"][:, H:].T)
    w = put_w(w, 10, params["w_ih"][0:H, :].T)
    w = put_w(w, 11, params["w_ih"][H:2 * H, :].T)
    w = put_w(w, 12, params["w_ih"][2 * H:3 * H, :].T)

    b = put_b(b, 0, params["b_emb"])
    b = put_b(b, 1, params["b_attn"])
    b = put_b(b, 2, params["b_comb"])
    b = put_b(b, 3, params["b_attn2"])
    b = put_b(b, 5, params["b_hh"][0:H])
    b = put_b(b, 6, params["b_hh"][H:2 * H])
    b = put_b(b, 7, params["b_hh"][2 * H:3 * H])
    b = put_b(b, 10, params["b_ih"][0:H])
    b = put_b(b, 11, params["b_ih"][H:2 * H])
    b = put_b(b, 12, params["b_ih"][2 * H:3 * H])
    return w, b


def attn_decoder_forward(params, x, hidden, encoder_outputs):
    """Pallas-backed forward.  hidden: (1, B, H) like PyTorch GRU hidden."""
    B, In = x.shape
    H = params["w_emb"].shape[0]
    S = encoder_outputs.shape[1]
    assert In <= H, "packed-slab layout assumes input_size <= hidden_size"
    h = hidden.reshape(B, H)

    w_slab, b_slab = _pack_params(params, H, S)
    x_pad = jnp.zeros((B, H), jnp.float32).at[:, :In].set(x)

    # NOTE: whole encoder_outputs kept VMEM-resident (tiny here); at production
    # B*S*H sizes tile it over S with a BlockSpec and raise vmem_limit_bytes
    # (first constraint on v7x's 64 MiB VMEM).
    vmem = pl.BlockSpec(memory_space=pltpu.MemorySpace.VMEM)
    slab = pl.pallas_call(
        attn_decoder_kernel,
        out_shape=jax.ShapeDtypeStruct((B, 4 * LANE), jnp.float32),
        in_specs=[vmem] * 5,
        out_specs=vmem,
    )(x_pad, h, encoder_outputs, w_slab, b_slab)

    out = slab[:, 0]                              # (B,)
    h_new = slab[:, LANE:LANE + H]                # (B, H)
    attn1 = slab[:, 2 * LANE:2 * LANE + S]        # (B, S)
    attn2 = slab[:, 3 * LANE:3 * LANE + H]        # (B, H)
    return out, h_new.reshape(1, B, H), attn1, attn2


def reference_forward(params, x, hidden, encoder_outputs):
    """Pure-JAX reference mirroring the PyTorch forward."""
    B = x.shape[0]
    H = params["w_emb"].shape[0]
    h = hidden.reshape(B, H)
    emb = jax.nn.relu(x @ params["w_emb"].T + params["b_emb"])
    attn1 = jax.nn.softmax(
        jnp.concatenate([emb, h], 1) @ params["w_attn"].T + params["b_attn"], axis=1)
    attn_applied = jnp.einsum("bs,bsh->bh", attn1, encoder_outputs)
    wi = jax.nn.relu(
        jnp.concatenate([emb, attn_applied], 1) @ params["w_comb"].T + params["b_comb"])
    gi = wi @ params["w_ih"].T + params["b_ih"]
    gh = h @ params["w_hh"].T + params["b_hh"]
    i_r, i_z, i_n = jnp.split(gi, 3, axis=1)
    h_r, h_z, h_n = jnp.split(gh, 3, axis=1)
    r = jax.nn.sigmoid(i_r + h_r)
    z = jax.nn.sigmoid(i_z + h_z)
    n = jnp.tanh(i_n + r * h_n)
    h_new = (1.0 - z) * n + z * h
    attn2 = jax.nn.softmax(
        jnp.concatenate([emb, encoder_outputs[:, -1, :]], 1) @ params["w_attn2"].T
        + params["b_attn2"], axis=1)
    out = jnp.sum(h_new * attn2, axis=1)
    return out, h_new.reshape(1, B, H), attn1, attn2


if __name__ == "__main__":
    B, input_size, hidden_size, seq_length = 8, 16, 32, 8

    key = jax.random.PRNGKey(0)
    k_p, k_x, k_h, k_e = jax.random.split(key, 4)
    params = init_params(k_p, input_size, hidden_size, seq_length)

    x = jax.random.normal(k_x, (B, input_size), jnp.float32)
    hidden = jax.random.normal(k_h, (1, B, hidden_size), jnp.float32)
    encoder_outputs = jax.random.normal(k_e, (B, seq_length, hidden_size), jnp.float32)

    fwd = jax.jit(attn_decoder_forward)
    out, h_new, a1, a2 = fwd(params, x, hidden, encoder_outputs)
    jax.block_until_ready((out, h_new, a1, a2))

    r_out, r_h, r_a1, r_a2 = reference_forward(params, x, hidden, encoder_outputs)
    # approx-reciprocal softmax -> slightly looser tolerance than exact divide
    tol = dict(atol=2e-3, rtol=5e-3)
    assert np.allclose(np.asarray(out), np.asarray(r_out), **tol)
    assert np.allclose(np.asarray(h_new), np.asarray(r_h), **tol)
    assert np.allclose(np.asarray(a1), np.asarray(r_a1), **tol)
    assert np.allclose(np.asarray(a2), np.asarray(r_a2), **tol)

    print("KERNEL_OK")
</pallas_src>

<mosaic_0001>
module attributes {stable_mosaic.version = 11 : i64} {
  func.func @attn_decoder_kernel(%arg0: memref<8x32xf32, #tpu.memory_space<vmem>>, %arg1: memref<8x32xf32, #tpu.memory_space<vmem>>, %arg2: memref<8x8x32xf32, #tpu.memory_space<vmem>>, %arg3: memref<32x1664xf32, #tpu.memory_space<vmem>>, %arg4: memref<1x1664xf32, #tpu.memory_space<vmem>>, %arg5: memref<8x512xf32, #tpu.memory_space<vmem>>) attributes {dimension_semantics = [], scalar_prefetch = 0 : i64, scratch_operands = 0 : i64, tpu.core_type = #tpu.core_type<tc>} {
    %c0 = arith.constant 0 : index
    %c0_0 = arith.constant 0 : index
    %0 = vector.load %arg0[%c0, %c0_0] : memref<8x32xf32, #tpu.memory_space<vmem>>, vector<8x32xf32>
    %c0_1 = arith.constant 0 : index
    %c0_2 = arith.constant 0 : index
    %1 = vector.load %arg1[%c0_1, %c0_2] : memref<8x32xf32, #tpu.memory_space<vmem>>, vector<8x32xf32>
    %c0_3 = arith.constant 0 : index
    %c0_4 = arith.constant 0 : index
    %c0_5 = arith.constant 0 : index
    %2 = vector.load %arg2[%c0_3, %c0_4, %c0_5] : memref<8x8x32xf32, #tpu.memory_space<vmem>>, vector<8x8x32xf32>
    %c0_6 = arith.constant 0 : index
    %c0_7 = arith.constant 0 : index
    %3 = vector.load %arg3[%c0_6, %c0_7] : memref<32x1664xf32, #tpu.memory_space<vmem>>, vector<32x128xf32>
    %cst = arith.constant dense<0.000000e+00> : vector<8x128xf32>
    %4 = tpu.matmul %0, %3, %cst {dimension_numbers = #tpu.dot_dimension_numbers<[1], [0], [0], [1], [0, 0, 1, 1], [], []>} : vector<8x32xf32>, vector<32x128xf32>, vector<8x128xf32> -> vector<8x128xf32>
    %c0_8 = arith.constant 0 : index
    %c0_9 = arith.constant 0 : index
    %5 = vector.load %arg4[%c0_8, %c0_9] : memref<1x1664xf32, #tpu.memory_space<vmem>>, vector<1x128xf32>
    %6 = vector.broadcast %5 : vector<1x128xf32> to vector<8x128xf32>
    %7 = arith.addf %4, %6 : vector<8x128xf32>
    %8 = vector.extract_strided_slice %7 {offsets = [0, 0], sizes = [8, 32], strides = [1, 1]} : vector<8x128xf32> to vector<8x32xf32>
    %cst_10 = arith.constant 0.000000e+00 : f32
    %9 = vector.broadcast %cst_10 : f32 to vector<8x32xf32>
    %10 = arith.maximumf %8, %9 : vector<8x32xf32>
    %c0_11 = arith.constant 0 : index
    %c128 = arith.constant 128 : index
    %11 = vector.load %arg3[%c0_11, %c128] : memref<32x1664xf32, #tpu.memory_space<vmem>>, vector<32x384xf32>
    %cst_12 = arith.constant dense<0.000000e+00> : vector<8x384xf32>
    %12 = tpu.matmul %10, %11, %cst_12 {dimension_numbers = #tpu.dot_dimension_numbers<[1], [0], [0], [1], [0, 0, 1, 1], [], []>} : vector<8x32xf32>, vector<32x384xf32>, vector<8x384xf32> -> vector<8x384xf32>
    %c0_13 = arith.constant 0 : index
    %c128_14 = arith.constant 128 : index
    %13 = vector.load %arg4[%c0_13, %c128_14] : memref<1x1664xf32, #tpu.memory_space<vmem>>, vector<1x384xf32>
    %14 = vector.broadcast %13 : vector<1x384xf32> to vector<8x384xf32>
    %15 = arith.addf %12, %14 : vector<8x384xf32>
    %c0_15 = arith.constant 0 : index
    %c512 = arith.constant 512 : index
    %16 = vector.load %arg3[%c0_15, %c512] : memref<32x1664xf32, #tpu.memory_space<vmem>>, vector<32x512xf32>
    %cst_16 = arith.constant dense<0.000000e+00> : vector<8x512xf32>
    %17 = tpu.matmul %1, %16, %cst_16 {dimension_numbers = #tpu.dot_dimension_numbers<[1], [0], [0], [1], [0, 0, 1, 1], [], []>} : vector<8x32xf32>, vector<32x512xf32>, vector<8x512xf32> -> vector<8x512xf32>
    %c0_17 = arith.constant 0 : index
    %c512_18 = arith.constant 512 : index
    %18 = vector.load %arg4[%c0_17, %c512_18] : memref<1x1664xf32, #tpu.memory_space<vmem>>, vector<1x512xf32>
    %19 = vector.broadcast %18 : vector<1x512xf32> to vector<8x512xf32>
    %20 = arith.addf %17, %19 : vector<8x512xf32>
    %21 = vector.extract_strided_slice %15 {offsets = [0, 0], sizes = [8, 8], strides = [1, 1]} : vector<8x384xf32> to vector<8x8xf32>
    %22 = vector.extract_strided_slice %20 {offsets = [0, 0], sizes = [8, 8], strides = [1, 1]} : vector<8x512xf32> to vector<8x8xf32>
    %23 = arith.addf %21, %22 : vector<8x8xf32>
    %cst_19 = arith.constant dense<0xFF800000> : vector<8xf32>
    %24 = vector.multi_reduction <maximumf>, %23, %cst_19 [1] : vector<8x8xf32> to vector<8xf32>
    %25 = vector.shape_cast %24 : vector<8xf32> to vector<8x1xf32>
    %26 = vector.broadcast %25 : vector<8x1xf32> to vector<8x8xf32>
    %27 = arith.subf %23, %26 : vector<8x8xf32>
    %28 = math.exp %27 : vector<8x8xf32>
    %cst_20 = arith.constant dense<0.000000e+00> : vector<8xf32>
    %29 = vector.multi_reduction <add>, %28, %cst_20 [1] : vector<8x8xf32> to vector<8xf32>
    %30 = vector.shape_cast %29 : vector<8xf32> to vector<8x1xf32>
    %31 = tpu.reciprocal %30 {approx = true} : vector<8x1xf32> -> vector<8x1xf32>
    %32 = vector.broadcast %31 : vector<8x1xf32> to vector<8x8xf32>
    %33 = arith.mulf %28, %32 : vector<8x8xf32>
    %34 = vector.shape_cast %33 : vector<8x8xf32> to vector<8x8x1xf32>
    %35 = vector.broadcast %34 : vector<8x8x1xf32> to vector<8x8x32xf32>
    %36 = arith.mulf %35, %2 : vector<8x8x32xf32>
    %cst_21 = arith.constant dense<0.000000e+00> : vector<8x32xf32>
    %37 = vector.multi_reduction <add>, %36, %cst_21 [1] : vector<8x8x32xf32> to vector<8x32xf32>
    %38 = vector.extract_strided_slice %15 {offsets = [0, 128], sizes = [8, 32], strides = [1, 1]} : vector<8x384xf32> to vector<8x32xf32>
    %c0_22 = arith.constant 0 : index
    %c1024 = arith.constant 1024 : index
    %39 = vector.load %arg3[%c0_22, %c1024] : memref<32x1664xf32, #tpu.memory_space<vmem>>, vector<32x128xf32>
    %cst_23 = arith.constant dense<0.000000e+00> : vector<8x128xf32>
    %40 = tpu.matmul %37, %39, %cst_23 {dimension_numbers = #tpu.dot_dimension_numbers<[1], [0], [0], [1], [0, 0, 1, 1], [], []>} : vector<8x32xf32>, vector<32x128xf32>, vector<8x128xf32> -> vector<8x128xf32>
    %c0_24 = arith.constant 0 : index
    %c1024_25 = arith.constant 1024 : index
    %41 = vector.load %arg4[%c0_24, %c1024_25] : memref<1x1664xf32, #tpu.memory_space<vmem>>, vector<1x128xf32>
    %42 = vector.broadcast %41 : vector<1x128xf32> to vector<8x128xf32>
    %43 = arith.addf %40, %42 : vector<8x128xf32>
    %44 = vector.extract_strided_slice %43 {offsets = [0, 0], sizes = [8, 32], strides = [1, 1]} : vector<8x128xf32> to vector<8x32xf32>
    %45 = arith.addf %38, %44 : vector<8x32xf32>
    %cst_26 = arith.constant 0.000000e+00 : f32
    %46 = vector.broadcast %cst_26 : f32 to vector<8x32xf32>
    %47 = arith.maximumf %45, %46 : vector<8x32xf32>
    %c0_27 = arith.constant 0 : index
    %c1280 = arith.constant 1280 : index
    %48 = vector.load %arg3[%c0_27, %c1280] : memref<32x1664xf32, #tpu.memory_space<vmem>>, vector<32x384xf32>
    %cst_28 = arith.constant dense<0.000000e+00> : vector<8x384xf32>
    %49 = tpu.matmul %47, %48, %cst_28 {dimension_numbers = #tpu.dot_dimension_numbers<[1], [0], [0], [1], [0, 0, 1, 1], [], []>} : vector<8x32xf32>, vector<32x384xf32>, vector<8x384xf32> -> vector<8x384xf32>
    %c0_29 = arith.constant 0 : index
    %c1280_30 = arith.constant 1280 : index
    %50 = vector.load %arg4[%c0_29, %c1280_30] : memref<1x1664xf32, #tpu.memory_space<vmem>>, vector<1x384xf32>
    %51 = vector.broadcast %50 : vector<1x384xf32> to vector<8x384xf32>
    %52 = arith.addf %49, %51 : vector<8x384xf32>
    %53 = vector.extract_strided_slice %52 {offsets = [0, 0], sizes = [8, 32], strides = [1, 1]} : vector<8x384xf32> to vector<8x32xf32>
    %54 = vector.extract_strided_slice %52 {offsets = [0, 128], sizes = [8, 32], strides = [1, 1]} : vector<8x384xf32> to vector<8x32xf32>
    %55 = vector.extract_strided_slice %52 {offsets = [0, 256], sizes = [8, 32], strides = [1, 1]} : vector<8x384xf32> to vector<8x32xf32>
    %56 = vector.extract_strided_slice %20 {offsets = [0, 128], sizes = [8, 32], strides = [1, 1]} : vector<8x512xf32> to vector<8x32xf32>
    %57 = vector.extract_strided_slice %20 {offsets = [0, 256], sizes = [8, 32], strides = [1, 1]} : vector<8x512xf32> to vector<8x32xf32>
    %58 = vector.extract_strided_slice %20 {offsets = [0, 384], sizes = [8, 32], strides = [1, 1]} : vector<8x512xf32> to vector<8x32xf32>
    %59 = arith.addf %53, %56 : vector<8x32xf32>
    %60 = arith.negf %59 : vector<8x32xf32>
    %61 = math.exp %60 : vector<8x32xf32>
    %cst_31 = arith.constant 1.000000e+00 : f32
    %62 = vector.broadcast %cst_31 : f32 to vector<8x32xf32>
    %63 = arith.addf %62, %61 : vector<8x32xf32>
    %64 = arith.divf %62, %63 : vector<8x32xf32>
    %65 = arith.addf %54, %57 : vector<8x32xf32>
    %66 = arith.negf %65 : vector<8x32xf32>
    %67 = math.exp %66 : vector<8x32xf32>
    %cst_32 = arith.constant 1.000000e+00 : f32
    %68 = vector.broadcast %cst_32 : f32 to vector<8x32xf32>
    %69 = arith.addf %68, %67 : vector<8x32xf32>
    %70 = arith.divf %68, %69 : vector<8x32xf32>
    %71 = arith.mulf %64, %58 : vector<8x32xf32>
    %72 = arith.addf %55, %71 : vector<8x32xf32>
    %73 = math.tanh %72 : vector<8x32xf32>
    %cst_33 = arith.constant 1.000000e+00 : f32
    %74 = vector.broadcast %cst_33 : f32 to vector<8x32xf32>
    %75 = arith.subf %74, %70 : vector<8x32xf32>
    %76 = arith.mulf %75, %73 : vector<8x32xf32>
    %77 = arith.mulf %70, %1 : vector<8x32xf32>
    %78 = arith.addf %76, %77 : vector<8x32xf32>
    %79 = vector.extract_strided_slice %2 {offsets = [0, 7, 0], sizes = [8, 1, 32], strides = [1, 1, 1]} : vector<8x8x32xf32> to vector<8x1x32xf32>
    %80 = vector.shape_cast %79 : vector<8x1x32xf32> to vector<8x32xf32>
    %81 = vector.extract_strided_slice %15 {offsets = [0, 256], sizes = [8, 32], strides = [1, 1]} : vector<8x384xf32> to vector<8x32xf32>
    %c0_34 = arith.constant 0 : index
    %c1152 = arith.constant 1152 : index
    %82 = vector.load %arg3[%c0_34, %c1152] : memref<32x1664xf32, #tpu.memory_space<vmem>>, vector<32x128xf32>
    %cst_35 = arith.constant dense<0.000000e+00> : vector<8x128xf32>
    %83 = tpu.matmul %80, %82, %cst_35 {dimension_numbers = #tpu.dot_dimension_numbers<[1], [0], [0], [1], [0, 0, 1, 1], [], []>} : vector<8x32xf32>, vector<32x128xf32>, vector<8x128xf32> -> vector<8x128xf32>
    %c0_36 = arith.constant 0 : index
    %c1152_37 = arith.constant 1152 : index
    %84 = vector.load %arg4[%c0_36, %c1152_37] : memref<1x1664xf32, #tpu.memory_space<vmem>>, vector<1x128xf32>
    %85 = vector.broadcast %84 : vector<1x128xf32> to vector<8x128xf32>
    %86 = arith.addf %83, %85 : vector<8x128xf32>
    %87 = vector.extract_strided_slice %86 {offsets = [0, 0], sizes = [8, 32], strides = [1, 1]} : vector<8x128xf32> to vector<8x32xf32>
    %88 = arith.addf %81, %87 : vector<8x32xf32>
    %cst_38 = arith.constant dense<0xFF800000> : vector<8xf32>
    %89 = vector.multi_reduction <maximumf>, %88, %cst_38 [1] : vector<8x32xf32> to vector<8xf32>
    %90 = vector.shape_cast %89 : vector<8xf32> to vector<8x1xf32>
    %91 = vector.broadcast %90 : vector<8x1xf32> to vector<8x32xf32>
    %92 = arith.subf %88, %91 : vector<8x32xf32>
    %93 = math.exp %92 : vector<8x32xf32>
    %cst_39 = arith.constant dense<0.000000e+00> : vector<8xf32>
    %94 = vector.multi_reduction <add>, %93, %cst_39 [1] : vector<8x32xf32> to vector<8xf32>
    %95 = vector.shape_cast %94 : vector<8xf32> to vector<8x1xf32>
    %96 = tpu.reciprocal %95 {approx = true} : vector<8x1xf32> -> vector<8x1xf32>
    %97 = vector.broadcast %96 : vector<8x1xf32> to vector<8x32xf32>
    %98 = arith.mulf %93, %97 : vector<8x32xf32>
    %99 = arith.mulf %78, %98 : vector<8x32xf32>
    %cst_40 = arith.constant dense<0.000000e+00> : vector<8xf32>
    %100 = vector.multi_reduction <add>, %99, %cst_40 [1] : vector<8x32xf32> to vector<8xf32>
    %101 = vector.shape_cast %100 : vector<8xf32> to vector<8x1xf32>
    %cst_41 = arith.constant 0.000000e+00 : f32
    %102 = vector.broadcast %cst_41 : f32 to vector<8x127xf32>
    %103 = tpu.concatenate %101, %102 in 1 : vector<8x1xf32>, vector<8x127xf32> -> vector<8x128xf32>
    %c0_42 = arith.constant 0 : index
    %c0_43 = arith.constant 0 : index
    %104 = vector.load %arg5[%c0_42, %c0_43] : memref<8x512xf32, #tpu.memory_space<vmem>>, vector<8x128xf32>
    tpu.vector_store %arg5[%c0_42, %c0_43], %103 {strides = array<i32>} : memref<8x512xf32, #tpu.memory_space<vmem>>, vector<8x128xf32>,
    %cst_44 = arith.constant 0.000000e+00 : f32
    %105 = vector.broadcast %cst_44 : f32 to vector<8x96xf32>
    %106 = tpu.concatenate %78, %105 in 1 : vector<8x32xf32>, vector<8x96xf32> -> vector<8x128xf32>
    %c0_45 = arith.constant 0 : index
    %c128_46 = arith.constant 128 : index
    %107 = vector.load %arg5[%c0_45, %c128_46] : memref<8x512xf32, #tpu.memory_space<vmem>>, vector<8x128xf32>
    tpu.vector_store %arg5[%c0_45, %c128_46], %106 {strides = array<i32>} : memref<8x512xf32, #tpu.memory_space<vmem>>, vector<8x128xf32>,
    %cst_47 = arith.constant 0.000000e+00 : f32
    %108 = vector.broadcast %cst_47 : f32 to vector<8x120xf32>
    %109 = tpu.concatenate %33, %108 in 1 : vector<8x8xf32>, vector<8x120xf32> -> vector<8x128xf32>
    %c0_48 = arith.constant 0 : index
    %c256 = arith.constant 256 : index
    %110 = vector.load %arg5[%c0_48, %c256] : memref<8x512xf32, #tpu.memory_space<vmem>>, vector<8x128xf32>
    tpu.vector_store %arg5[%c0_48, %c256], %109 {strides = array<i32>} : memref<8x512xf32, #tpu.memory_space<vmem>>, vector<8x128xf32>,
    %cst_49 = arith.constant 0.000000e+00 : f32
    %111 = vector.broadcast %cst_49 : f32 to vector<8x96xf32>
    %112 = tpu.concatenate %98, %111 in 1 : vector<8x32xf32>, vector<8x96xf32> -> vector<8x128xf32>
    %c0_50 = arith.constant 0 : index
    %c384 = arith.constant 384 : index
    %113 = vector.load %arg5[%c0_50, %c384] : memref<8x512xf32, #tpu.memory_space<vmem>>, vector<8x128xf32>
    tpu.vector_store %arg5[%c0_50, %c384], %112 {strides = array<i32>} : memref<8x512xf32, #tpu.memory_space<vmem>>, vector<8x128xf32>,
    return
  }
}

</mosaic_0001>

<llo_original>
// kernel: attn_decoder_forward.1
$region0: #{attn_decoder_forward.1}
  #allocation0 [shape = 'u32[]', space=smem, size = 0x4, offset = 0x4, fixed_abs, tag = 'smem constant byte address 0x4 - core index']
  #allocation1 [shape = 'u32[144,128]{1,0:T(1,128)}', space=vmem, size = 0x12000, scoped, tag = 'internal scratch']
  %s0 = inlined_call_operand.vmem [shape: f32[8,32], index: 0, kind: input, shape index: {}]
  %s1 = inlined_call_operand.vmem [shape: f32[8,32], index: 1, kind: input, shape index: {}]
  %s2 = inlined_call_operand.vmem [shape: f32[8,8,32], index: 2, kind: input, shape index: {}]
  %s3 = inlined_call_operand.vmem [shape: f32[32,1664], index: 3, kind: input, shape index: {}]
  %s4 = inlined_call_operand.vmem [shape: f32[1,1664], index: 4, kind: input, shape index: {}]
  %s5 = inlined_call_operand.vmem [shape: f32[8,512], index: 5, kind: output, shape index: {}]
  %s6 = sld [smem:[#allocation0]]
  $region30: #{attn_decoder_forward.1} parent=0
    _
  %s8 = ssub.s32 1, %s6
  %s9 = scalar_select 0, %s8, %s6
  // Predicated region
  $region2: #{attn_decoder_forward.1} parent=0 // pred_check
    _
  $region3: #{attn_decoder_forward.1} parent=0 // pred_check_branch
    %11 = sbr.rel (0) target = $region5
  $region4: #{attn_decoder_forward.1} parent=0 // pred_region
    _
  $region5: #{attn_decoder_forward.1} parent=0 // pred_fallthru
    _
  // Predicated region
  $region6: #{attn_decoder_forward.1} parent=0 // pred_check
    _
  $region7: #{attn_decoder_forward.1} parent=0 // pred_check_branch
    %13 = sbr.rel (0) target = $region9
  $region8: #{attn_decoder_forward.1} parent=0 // pred_region
    _
  $region9: #{attn_decoder_forward.1} parent=0 // pred_fallthru
    _
  // Predicated region
  $region10: #{attn_decoder_forward.1} parent=0 // pred_check
    _
  $region11: #{attn_decoder_forward.1} parent=0 // pred_check_branch
    %15 = sbr.rel (0) target = $region13
  $region12: #{attn_decoder_forward.1} parent=0 // pred_region
    _
  $region13: #{attn_decoder_forward.1} parent=0 // pred_fallthru
    _
  // Predicated region
  $region14: #{attn_decoder_forward.1} parent=0 // pred_check
    _
  $region15: #{attn_decoder_forward.1} parent=0 // pred_check_branch
    %17 = sbr.rel (0) target = $region17
  $region16: #{attn_decoder_forward.1} parent=0 // pred_region
    _
  $region17: #{attn_decoder_forward.1} parent=0 // pred_fallthru
    _
  // Predicated region
  $region18: #{attn_decoder_forward.1} parent=0 // pred_check
    _
  $region19: #{attn_decoder_forward.1} parent=0 // pred_check_branch
    %19 = sbr.rel (0) target = $region21
  $region20: #{attn_decoder_forward.1} parent=0 // pred_region
    _
  $region21: #{attn_decoder_forward.1} parent=0 // pred_fallthru
    _
  %v20 = vld [vmem:[%s0] sm:$0xff]
  %v21 = vld [vmem:[%s1] sm:$0xff]
  %v22 = vld [vmem:[%s2] sm:$0xff]
  %v23 = vld [vmem:[%s2 + $0x8] sm:$0xff]
  %v24 = vld [vmem:[%s2 + $0x10] sm:$0xff]
  %v25 = vld [vmem:[%s2 + $0x18] sm:$0xff]
  %v26 = vld [vmem:[%s2 + $0x20] sm:$0xff]
  %v27 = vld [vmem:[%s2 + $0x28] sm:$0xff]
  %v28 = vld [vmem:[%s2 + $0x30] sm:$0xff]
  %v29 = vld [vmem:[%s2 + $0x38] sm:$0xff]
  %v30 = vld [vmem:[%s3] sm:$0xff]
  %v31 = vld [vmem:[%s3 + $0x68] sm:$0xff]
  %v32 = vld [vmem:[%s3 + $0xd0] sm:$0xff]
  %v33 = vld [vmem:[%s3 + $0x138] sm:$0xff]
  %v34 = vld [vmem:[%s4] sm:$0x1]
  %v36 = vlaneseq
  %v37 = vshrl.u32 %v36, 7
  %v38 = vsub.s32 0, %v37
  %v39 = vrot.slane %v34, %v38
  %vm41 = vcmask 261120
  %v43 = vsel %vm41, %v20, 0
  %45 = vmatprep.subr.mxu0 0.0
  %46 = vmatpush1.msra.mxu0 %v30
  %47 = vmatprep.subr.mxu0 0.0
  %48 = vmatpush1.msra.mxu0 %v31
  %49 = vmatprep.subr.mxu0 0.0
  %50 = vmatpush1.msra.mxu0 %v32
  %51 = vmatprep.subr.mxu0 0.0
  %52 = vmatpush1.msra.mxu0 %v33
  %53 = vmatprep.subr.mxu0 0.0
  %54 = vmatpush1.msra.mxu0 0.0
  %55 = vmatprep.subr.mxu0 0.0
  %56 = vmatpush1.msra.mxu0 0.0
  %57 = vmatprep.subr.mxu0 0.0
  %58 = vmatpush1.msra.mxu0 0.0
  %59 = vmatprep.subr.mxu0 0.0
  %60 = vmatpush1.msra.mxu0 0.0
  %61 = vmatprep.subr.mxu0 0.0
  %62 = vmatpush1.msra.mxu0 0.0
  %63 = vmatprep.subr.mxu0 0.0
  %64 = vmatpush1.msra.mxu0 0.0
  %65 = vmatprep.subr.mxu0 0.0
  %66 = vmatpush1.msra.mxu0 0.0
  %67 = vmatprep.subr.mxu0 0.0
  %68 = vmatpush1.msra.mxu0 0.0
  %69 = vmatprep.subr.mxu0 0.0
  %70 = vmatpush1.msra.mxu0 0.0
  %71 = vmatprep.subr.mxu0 0.0
  %72 = vmatpush1.msra.mxu0 0.0
  %73 = vmatprep.subr.mxu0 0.0
  %74 = vmatpush1.msra.mxu0 0.0
  %75 = vmatprep.subr.mxu0 0.0
  %76 = vmatpush1.msra.mxu0 0.0
  %77 = vmatprep.subr.mxu0 0.0
  %78 = vmatpush1.msra.mxu0 0.0
  %79 = vmatprep.subr.mxu0 0.0
  %80 = vmatpush1.msra.mxu0 0.0
  %81 = vmatprep.subr.mxu0 0.0
  %82 = vmatpush1.msra.mxu0 0.0
  %83 = vmatprep.subr.mxu0 0.0
  %84 = vmatpush1.msra.mxu0 0.0
  %85 = vmatprep.subr.mxu0 0.0
  %86 = vmatpush1.msra.mxu0 0.0
  %87 = vmatprep.subr.mxu0 0.0
  %88 = vmatpush1.msra.mxu0 0.0
  %89 = vmatprep.subr.mxu0 0.0
  %90 = vmatpush1.msra.mxu0 0.0
  %91 = vmatprep.subr.mxu0 0.0
  %92 = vmatpush1.msra.mxu0 0.0
  %93 = vmatprep.subr.mxu0 0.0
  %94 = vmatpush1.msra.mxu0 0.0
  %95 = vmatprep.subr.mxu0 0.0
  %96 = vmatpush1.msra.mxu0 0.0
  %97 = vmatprep.subr.mxu0 0.0
  %98 = vmatpush1.msra.mxu0 0.0
  %99 = vmatprep.subr.mxu0 0.0
  %100 = vmatpush1.msra.mxu0 0.0
  %101 = vmatprep.subr.mxu0 0.0
  %102 = vmatpush1.msra.mxu0 0.0
  %103 = vmatprep.subr.mxu0 0.0
  %104 = vmatpush1.msra.mxu0 0.0
  %105 = vmatprep.subr.mxu0 0.0
  %106 = vmatpush1.msra.mxu0 0.0
  %107 = vmatprep.subr.mxu0 0.0
  %108 = vmatpush1.msra.mxu0 0.0
  %109 = vmatprep.mubr.f32.mxu0 0.0
  %110 = vmatmul.mubr.f32.gmra.mrb[0].mxu0 %v43
  %v111 = vpop.f32.mrb[0].mxu0
  %v112 = vadd.f32 %v39, %v111
  %v113 = vpop.f32.mrb[0].mxu0
  %114 = vdwg.mxu0
  %v115 = vmax.f32 %v112, 0.0
  %v116 = vld [vmem:[%s3 + $0x8] sm:$0xff]
  %v117 = vld [vmem:[%s3 + $0x10] sm:$0xff]
  %v118 = vld [vmem:[%s3 + $0x18] sm:$0xff]
  %v119 = vld [vmem:[%s3 + $0x70] sm:$0xff]
  %v120 = vld [vmem:[%s3 + $0x78] sm:$0xff]
  %v121 = vld [vmem:[%s3 + $0x80] sm:$0xff]
  %v122 = vld [vmem:[%s3 + $0xd8] sm:$0xff]
  %v123 = vld [vmem:[%s3 + $0xe0] sm:$0xff]
  %v124 = vld [vmem:[%s3 + $0xe8] sm:$0xff]
  %v125 = vld [vmem:[%s3 + $0x140] sm:$0xff]
  %v126 = vld [vmem:[%s3 + $0x148] sm:$0xff]
  %v127 = vld [vmem:[%s3 + $0x150] sm:$0xff]
  %v128 = vld [vmem:[%s4 + $0x1] sm:$0x7]
  %v130 = vlaneseq
  %v131 = vshrl.u32 %v130, 7
  %v132 = vsub.s32 0, %v131
  %v133 = vrot.slane %v128, %v132
  %v134 = vlaneseq
  %v135 = vshrl.u32 %v134, 7
  %v136 = vsub.s32 1, %v135
  %v137 = vrot.slane %v128, %v136
  %v138 = vlaneseq
  %v139 = vshrl.u32 %v138, 7
  %v140 = vsub.s32 2, %v139
  %v141 = vrot.slane %v128, %v140
  %v146 = vsel %vm41, %v115, 0
  %148 = vmatprep.subr.mxu0 %v117
  %149 = vmatpush1.msra.mxu0 %v116
  %150 = vmatprep.subr.mxu0 %v120
  %151 = vmatpush1.msra.mxu0 %v119
  %152 = vmatprep.subr.mxu0 %v123
  %153 = vmatpush1.msra.mxu0 %v122
  %154 = vmatprep.subr.mxu0 %v126
  %155 = vmatpush1.msra.mxu0 %v125
  %156 = vmatprep.subr.mxu0 0.0
  %157 = vmatpush1.msra.mxu0 0.0
  %158 = vmatprep.subr.mxu0 0.0
  %159 = vmatpush1.msra.mxu0 0.0
  %160 = vmatprep.subr.mxu0 0.0
  %161 = vmatpush1.msra.mxu0 0.0
  %162 = vmatprep.subr.mxu0 0.0
  %163 = vmatpush1.msra.mxu0 0.0
  %164 = vmatprep.subr.mxu0 0.0
  %165 = vmatpush1.msra.mxu0 0.0
  %166 = vmatprep.subr.mxu0 0.0
  %167 = vmatpush1.msra.mxu0 0.0
  %168 = vmatprep.subr.mxu0 0.0
  %169 = vmatpush1.msra.mxu0 0.0
  %170 = vmatprep.subr.mxu0 0.0
  %171 = vmatpush1.msra.mxu0 0.0
  %172 = vmatprep.subr.mxu0 0.0
  %173 = vmatpush1.msra.mxu0 0.0
  %174 = vmatprep.subr.mxu0 0.0
  %175 = vmatpush1.msra.mxu0 0.0
  %176 = vmatprep.subr.mxu0 0.0
  %177 = vmatpush1.msra.mxu0 0.0
  %178 = vmatprep.subr.mxu0 0.0
  %179 = vmatpush1.msra.mxu0 0.0
  %180 = vmatprep.subr.mxu0 0.0
  %181 = vmatpush1.msra.mxu0 0.0
  %182 = vmatprep.subr.mxu0 0.0
  %183 = vmatpush1.msra.mxu0 0.0
  %184 = vmatprep.subr.mxu0 0.0
  %185 = vmatpush1.msra.mxu0 0.0
  %186 = vmatprep.subr.mxu0 0.0
  %187 = vmatpush1.msra.mxu0 0.0
  %188 = vmatprep.subr.mxu0 0.0
  %189 = vmatpush1.msra.mxu0 0.0
  %190 = vmatprep.subr.mxu0 0.0
  %191 = vmatpush1.msra.mxu0 0.0
  %192 = vmatprep.subr.mxu0 0.0
  %193 = vmatpush1.msra.mxu0 0.0
  %194 = vmatprep.subr.mxu0 0.0
  %195 = vmatpush1.msra.mxu0 0.0
  %196 = vmatprep.subr.mxu0 0.0
  %197 = vmatpush1.msra.mxu0 0.0
  %198 = vmatprep.subr.mxu0 0.0
  %199 = vmatpush1.msra.mxu0 0.0
  %200 = vmatprep.subr.mxu0 0.0
  %201 = vmatpush1.msra.mxu0 0.0
  %202 = vmatprep.subr.mxu0 0.0
  %203 = vmatpush1.msra.mxu0 0.0
  %204 = vmatprep.subr.mxu0 0.0
  %205 = vmatpush1.msra.mxu0 0.0
  %206 = vmatprep.subr.mxu0 0.0
  %207 = vmatpush1.msra.mxu0 0.0
  %208 = vmatprep.subr.mxu0 0.0
  %209 = vmatpush1.msra.mxu0 0.0
  %210 = vmatprep.subr.mxu0 0.0
  %211 = vmatpush1.msra.mxu0 0.0
  %212 = vmatprep.mubr.f32.mxu0 0.0
  %213 = vmatmul.mubr.f32.gmra.mrb[0].mxu0 %v146
  %v214 = vpop.f32.mrb[0].mxu0
  %v215 = vadd.f32 %v133, %v214
  %v216 = vpop.f32.mrb[0].mxu0
  %v217 = vadd.f32 %v137, %v216
  %218 = vdwg.mxu0
  %219 = vmatprep.subr.mxu0 0.0
  %220 = vmatpush1.msra.mxu0 %v118
  %221 = vmatprep.subr.mxu0 0.0
  %222 = vmatpush1.msra.mxu0 %v121
  %223 = vmatprep.subr.mxu0 0.0
  %224 = vmatpush1.msra.mxu0 %v124
  %225 = vmatprep.subr.mxu0 0.0
  %226 = vmatpush1.msra.mxu0 %v127
  %227 = vmatprep.subr.mxu0 0.0
  %228 = vmatpush1.msra.mxu0 0.0
  %229 = vmatprep.subr.mxu0 0.0
  %230 = vmatpush1.msra.mxu0 0.0
  %231 = vmatprep.subr.mxu0 0.0
  %232 = vmatpush1.msra.mxu0 0.0
  %233 = vmatprep.subr.mxu0 0.0
  %234 = vmatpush1.msra.mxu0 0.0
  %235 = vmatprep.subr.mxu0 0.0
  %236 = vmatpush1.msra.mxu0 0.0
  %237 = vmatprep.subr.mxu0 0.0
  %238 = vmatpush1.msra.mxu0 0.0
  %239 = vmatprep.subr.mxu0 0.0
  %240 = vmatpush1.msra.mxu0 0.0
  %241 = vmatprep.subr.mxu0 0.0
  %242 = vmatpush1.msra.mxu0 0.0
  %243 = vmatprep.subr.mxu0 0.0
  %244 = vmatpush1.msra.mxu0 0.0
  %245 = vmatprep.subr.mxu0 0.0
  %246 = vmatpush1.msra.mxu0 0.0
  %247 = vmatprep.subr.mxu0 0.0
  %248 = vmatpush1.msra.mxu0 0.0
  %249 = vmatprep.subr.mxu0 0.0
  %250 = vmatpush1.msra.mxu0 0.0
  %251 = vmatprep.subr.mxu0 0.0
  %252 = vmatpush1.msra.mxu0 0.0
  %253 = vmatprep.subr.mxu0 0.0
  %254 = vmatpush1.msra.mxu0 0.0
  %255 = vmatprep.subr.mxu0 0.0
  %256 = vmatpush1.msra.mxu0 0.0
  %257 = vmatprep.subr.mxu0 0.0
  %258 = vmatpush1.msra.mxu0 0.0
  %259 = vmatprep.subr.mxu0 0.0
  %260 = vmatpush1.msra.mxu0 0.0
  %261 = vmatprep.subr.mxu0 0.0
  %262 = vmatpush1.msra.mxu0 0.0
  %263 = vmatprep.subr.mxu0 0.0
  %264 = vmatpush1.msra.mxu0 0.0
  %265 = vmatprep.subr.mxu0 0.0
  %266 = vmatpush1.msra.mxu0 0.0
  %267 = vmatprep.subr.mxu0 0.0
  %268 = vmatpush1.msra.mxu0 0.0
  %269 = vmatprep.subr.mxu0 0.0
  %270 = vmatpush1.msra.mxu0 0.0
  %271 = vmatprep.subr.mxu0 0.0
  %272 = vmatpush1.msra.mxu0 0.0
  %273 = vmatprep.subr.mxu0 0.0
  %274 = vmatpush1.msra.mxu0 0.0
  %275 = vmatprep.subr.mxu0 0.0
  %276 = vmatpush1.msra.mxu0 0.0
  %277 = vmatprep.subr.mxu0 0.0
  %278 = vmatpush1.msra.mxu0 0.0
  %279 = vmatprep.subr.mxu0 0.0
  %280 = vmatpush1.msra.mxu0 0.0
  %281 = vmatprep.subr.mxu0 0.0
  %282 = vmatpush1.msra.mxu0 0.0
  %283 = vmatprep.mubr.f32.mxu0 0.0
  %284 = vmatmul.mubr.f32.gmra.mrb[0].mxu0 %v146
  %v285 = vpop.f32.mrb[0].mxu0
  %v286 = vadd.f32 %v141, %v285
  %v287 = vpop.f32.mrb[0].mxu0
  %288 = vdwg.mxu0
  %v289 = vld [vmem:[%s3 + $0x20] sm:$0xff]
  %v290 = vld [vmem:[%s3 + $0x28] sm:$0xff]
  %v291 = vld [vmem:[%s3 + $0x30] sm:$0xff]
  %v292 = vld [vmem:[%s3 + $0x38] sm:$0xff]
  %v293 = vld [vmem:[%s3 + $0x88] sm:$0xff]
  %v294 = vld [vmem:[%s3 + $0x90] sm:$0xff]
  %v295 = vld [vmem:[%s3 + $0x98] sm:$0xff]
  %v296 = vld [vmem:[%s3 + $0xa0] sm:$0xff]
  %v297 = vld [vmem:[%s3 + $0xf0] sm:$0xff]
  %v298 = vld [vmem:[%s3 + $0xf8] sm:$0xff]
  %v299 = vld [vmem:[%s3 + $0x100] sm:$0xff]
  %v300 = vld [vmem:[%s3 + $0x108] sm:$0xff]
  %v301 = vld [vmem:[%s3 + $0x158] sm:$0xff]
  %v302 = vld [vmem:[%s3 + $0x160] sm:$0xff]
  %v303 = vld [vmem:[%s3 + $0x168] sm:$0xff]
  %v304 = vld [vmem:[%s3 + $0x170] sm:$0xff]
  %v305 = vld [vmem:[%s4 + $0x4] sm:$0xf]
  %v307 = vlaneseq
  %v308 = vshrl.u32 %v307, 7
  %v309 = vsub.s32 0, %v308
  %v310 = vrot.slane %v305, %v309
  %v311 = vlaneseq
  %v312 = vshrl.u32 %v311, 7
  %v313 = vsub.s32 1, %v312
  %v314 = vrot.slane %v305, %v313
  %v315 = vlaneseq
  %v316 = vshrl.u32 %v315, 7
  %v317 = vsub.s32 2, %v316
  %v318 = vrot.slane %v305, %v317
  %v319 = vlaneseq
  %v320 = vshrl.u32 %v319, 7
  %v321 = vsub.s32 3, %v320
  %v322 = vrot.slane %v305, %v321
  %v328 = vsel %vm41, %v21, 0
  %330 = vmatprep.subr.mxu0 %v290
  %331 = vmatpush1.msra.mxu0 %v289
  %332 = vmatprep.subr.mxu0 %v294
  %333 = vmatpush1.msra.mxu0 %v293
  %334 = vmatprep.subr.mxu0 %v298
  %335 = vmatpush1.msra.mxu0 %v297
  %336 = vmatprep.subr.mxu0 %v302
  %337 = vmatpush1.msra.mxu0 %v301
  %338 = vmatprep.subr.mxu0 0.0
  %339 = vmatpush1.msra.mxu0 0.0
  %340 = vmatprep.subr.mxu0 0.0
  %341 = vmatpush1.msra.mxu0 0.0
  %342 = vmatprep.subr.mxu0 0.0
  %343 = vmatpush1.msra.mxu0 0.0
  %344 = vmatprep.subr.mxu0 0.0
  %345 = vmatpush1.msra.mxu0 0.0
  %346 = vmatprep.subr.mxu0 0.0
  %347 = vmatpush1.msra.mxu0 0.0
  %348 = vmatprep.subr.mxu0 0.0
  %349 = vmatpush1.msra.mxu0 0.0
  %350 = vmatprep.subr.mxu0 0.0
  %351 = vmatpush1.msra.mxu0 0.0
  %352 = vmatprep.subr.mxu0 0.0
  %353 = vmatpush1.msra.mxu0 0.0
  %354 = vmatprep.subr.mxu0 0.0
  %355 = vmatpush1.msra.mxu0 0.0
  %356 = vmatprep.subr.mxu0 0.0
  %357 = vmatpush1.msra.mxu0 0.0
  %358 = vmatprep.subr.mxu0 0.0
  %359 = vmatpush1.msra.mxu0 0.0
  %360 = vmatprep.subr.mxu0 0.0
  %361 = vmatpush1.msra.mxu0 0.0
  %362 = vmatprep.subr.mxu0 0.0
  %363 = vmatpush1.msra.mxu0 0.0
  %364 = vmatprep.subr.mxu0 0.0
  %365 = vmatpush1.msra.mxu0 0.0
  %366 = vmatprep.subr.mxu0 0.0
  %367 = vmatpush1.msra.mxu0 0.0
  %368 = vmatprep.subr.mxu0 0.0
  %369 = vmatpush1.msra.mxu0 0.0
  %370 = vmatprep.subr.mxu0 0.0
  %371 = vmatpush1.msra.mxu0 0.0
  %372 = vmatprep.subr.mxu0 0.0
  %373 = vmatpush1.msra.mxu0 0.0
  %374 = vmatprep.subr.mxu0 0.0
  %375 = vmatpush1.msra.mxu0 0.0
  %376 = vmatprep.subr.mxu0 0.0
  %377 = vmatpush1.msra.mxu0 0.0
  %378 = vmatprep.subr.mxu0 0.0
  %379 = vmatpush1.msra.mxu0 0.0
  %380 = vmatprep.subr.mxu0 0.0
  %381 = vmatpush1.msra.mxu0 0.0
  %382 = vmatprep.subr.mxu0 0.0
  %383 = vmatpush1.msra.mxu0 0.0
  %384 = vmatprep.subr.mxu0 0.0
  %385 = vmatpush1.msra.mxu0 0.0
  %386 = vmatprep.subr.mxu0 0.0
  %387 = vmatpush1.msra.mxu0 0.0
  %388 = vmatprep.subr.mxu0 0.0
  %389 = vmatpush1.msra.mxu0 0.0
  %390 = vmatprep.subr.mxu0 0.0
  %391 = vmatpush1.msra.mxu0 0.0
  %392 = vmatprep.subr.mxu0 0.0
  %393 = vmatpush1.msra.mxu0 0.0
  %394 = vmatprep.mubr.f32.mxu0 0.0
  %395 = vmatmul.mubr.f32.gmra.mrb[0].mxu0 %v328
  %v396 = vpop.f32.mrb[0].mxu0
  %v397 = vadd.f32 %v310, %v396
  %v398 = vpop.f32.mrb[0].mxu0
  %v399 = vadd.f32 %v314, %v398
  %400 = vdwg.mxu0
  %401 = vmatprep.subr.mxu0 %v292
  %402 = vmatpush1.msra.mxu0 %v291
  %403 = vmatprep.subr.mxu0 %v296
  %404 = vmatpush1.msra.mxu0 %v295
  %405 = vmatprep.subr.mxu0 %v300
  %406 = vmatpush1.msra.mxu0 %v299
  %407 = vmatprep.subr.mxu0 %v304
  %408 = vmatpush1.msra.mxu0 %v303
  %409 = vmatprep.subr.mxu0 0.0
  %410 = vmatpush1.msra.mxu0 0.0
  %411 = vmatprep.subr.mxu0 0.0
  %412 = vmatpush1.msra.mxu0 0.0
  %413 = vmatprep.subr.mxu0 0.0
  %414 = vmatpush1.msra.mxu0 0.0
  %415 = vmatprep.subr.mxu0 0.0
  %416 = vmatpush1.msra.mxu0 0.0
  %417 = vmatprep.subr.mxu0 0.0
  %418 = vmatpush1.msra.mxu0 0.0
  %419 = vmatprep.subr.mxu0 0.0
  %420 = vmatpush1.msra.mxu0 0.0
  %421 = vmatprep.subr.mxu0 0.0
  %422 = vmatpush1.msra.mxu0 0.0
  %423 = vmatprep.subr.mxu0 0.0
  %424 = vmatpush1.msra.mxu0 0.0
  %425 = vmatprep.subr.mxu0 0.0
  %426 = vmatpush1.msra.mxu0 0.0
  %427 = vmatprep.subr.mxu0 0.0
  %428 = vmatpush1.msra.mxu0 0.0
  %429 = vmatprep.subr.mxu0 0.0
  %430 = vmatpush1.msra.mxu0 0.0
  %431 = vmatprep.subr.mxu0 0.0
  %432 = vmatpush1.msra.mxu0 0.0
  %433 = vmatprep.subr.mxu0 0.0
  %434 = vmatpush1.msra.mxu0 0.0
  %435 = vmatprep.subr.mxu0 0.0
  %436 = vmatpush1.msra.mxu0 0.0
  %437 = vmatprep.subr.mxu0 0.0
  %438 = vmatpush1.msra.mxu0 0.0
  %439 = vmatprep.subr.mxu0 0.0
  %440 = vmatpush1.msra.mxu0 0.0
  %441 = vmatprep.subr.mxu0 0.0
  %442 = vmatpush1.msra.mxu0 0.0
  %443 = vmatprep.subr.mxu0 0.0
  %444 = vmatpush1.msra.mxu0 0.0
  %445 = vmatprep.subr.mxu0 0.0
  %446 = vmatpush1.msra.mxu0 0.0
  %447 = vmatprep.subr.mxu0 0.0
  %448 = vmatpush1.msra.mxu0 0.0
  %449 = vmatprep.subr.mxu0 0.0
  %450 = vmatpush1.msra.mxu0 0.0
  %451 = vmatprep.subr.mxu0 0.0
  %452 = vmatpush1.msra.mxu0 0.0
  %453 = vmatprep.subr.mxu0 0.0
  %454 = vmatpush1.msra.mxu0 0.0
  %455 = vmatprep.subr.mxu0 0.0
  %456 = vmatpush1.msra.mxu0 0.0
  %457 = vmatprep.subr.mxu0 0.0
  %458 = vmatpush1.msra.mxu0 0.0
  %459 = vmatprep.subr.mxu0 0.0
  %460 = vmatpush1.msra.mxu0 0.0
  %461 = vmatprep.subr.mxu0 0.0
  %462 = vmatpush1.msra.mxu0 0.0
  %463 = vmatprep.subr.mxu0 0.0
  %464 = vmatpush1.msra.mxu0 0.0
  %465 = vmatprep.mubr.f32.mxu0 0.0
  %466 = vmatmul.mubr.f32.gmra.mrb[0].mxu0 %v328
  %v467 = vpop.f32.mrb[0].mxu0
  %v468 = vadd.f32 %v318, %v467
  %v469 = vpop.f32.mrb[0].mxu0
  %v470 = vadd.f32 %v322, %v469
  %471 = vdwg.mxu0
  %v472 = vadd.f32 %v215, %v397
  %vm473 = vcmask 64512
  %v474 = vsel %vm473, %v472, -inf
  %475 = vmax.xlane.f32.xlu0 %v474
  %v476 = vpop.xlane.xlu0 %475
  %v477 = vsub.f32 %v472, %v476
  %v478 = vmul.f32 %v477, 1.442695
  %v479 = vpow.pop %v478
  %v480 = vsel %vm473, %v479, 0.0
  %481 = vadd.xlane.f32.xlu0 %v480
  %v482 = vpop.xlane.xlu0 %481
  %v483 = vrcp.pop %v482
  %v484 = vmul.f32 %v479, %v483
  %v485 = vlaneseq
  %v486 = vshrl.u32 %v485, 7
  %v487 = vsub.s32 0, %v486
  %v488 = vrot.slane %v484, %v487
  %490 = vbcast.lane.b32.xlu0 %v488, 256
  %v491 = vpop.permute.xlu0 %490
  %v492 = vlaneseq
  %v493 = vshrl.u32 %v492, 7
  %v494 = vsub.s32 1, %v493
  %v495 = vrot.slane %v484, %v494
  %497 = vbcast.lane.b32.xlu0 %v495, 256
  %v498 = vpop.permute.xlu0 %497
  %v499 = vlaneseq
  %v500 = vshrl.u32 %v499, 7
  %v501 = vsub.s32 2, %v500
  %v502 = vrot.slane %v484, %v501
  %504 = vbcast.lane.b32.xlu0 %v502, 256
  %v505 = vpop.permute.xlu0 %504
  %v506 = vlaneseq
  %v507 = vshrl.u32 %v506, 7
  %v508 = vsub.s32 3, %v507
  %v509 = vrot.slane %v484, %v508
  %511 = vbcast.lane.b32.xlu0 %v509, 256
  %v512 = vpop.permute.xlu0 %511
  %v513 = vlaneseq
  %v514 = vshrl.u32 %v513, 7
  %v515 = vsub.s32 4, %v514
  %v516 = vrot.slane %v484, %v515
  %518 = vbcast.lane.b32.xlu0 %v516, 256
  %v519 = vpop.permute.xlu0 %518
  %v520 = vlaneseq
  %v521 = vshrl.u32 %v520, 7
  %v522 = vsub.s32 5, %v521
  %v523 = vrot.slane %v484, %v522
  %525 = vbcast.lane.b32.xlu0 %v523, 256
  %v526 = vpop.permute.xlu0 %525
  %v527 = vlaneseq
  %v528 = vshrl.u32 %v527, 7
  %v529 = vsub.s32 6, %v528
  %v530 = vrot.slane %v484, %v529
  %532 = vbcast.lane.b32.xlu0 %v530, 256
  %v533 = vpop.permute.xlu0 %532
  %v534 = vlaneseq
  %v535 = vshrl.u32 %v534, 7
  %v536 = vsub.s32 7, %v535
  %v537 = vrot.slane %v484, %v536
  %539 = vbcast.lane.b32.xlu0 %v537, 256
  %v540 = vpop.permute.xlu0 %539
  %v541 = vmul.f32 %v491, %v22
  %v542 = vmul.f32 %v498, %v23
  %v543 = vmul.f32 %v505, %v24
  %v544 = vmul.f32 %v512, %v25
  %v545 = vmul.f32 %v519, %v26
  %v546 = vmul.f32 %v526, %v27
  %v547 = vmul.f32 %v533, %v28
  %v548 = vmul.f32 %v540, %v29
  %v549 = vsel %vm41, %v541, 0.0
  %v550 = vrot.slane %v549, 4
  %v551 = vadd.f32 %v549, %v550
  %v552 = vrot.slane %v551, 2
  %v553 = vadd.f32 %v551, %v552
  %v554 = vrot.slane %v553, 1
  %v555 = vadd.f32 %v553, %v554
  %v556 = vsel %vm41, %v542, 0.0
  %v557 = vrot.slane %v556, 4
  %v558 = vadd.f32 %v556, %v557
  %v559 = vrot.slane %v558, 2
  %v560 = vadd.f32 %v558, %v559
  %v561 = vrot.slane %v560, 1
  %v562 = vadd.f32 %v560, %v561
  %v563 = vsel %vm41, %v543, 0.0
  %v564 = vrot.slane %v563, 4
  %v565 = vadd.f32 %v563, %v564
  %v566 = vrot.slane %v565, 2
  %v567 = vadd.f32 %v565, %v566
  %v568 = vrot.slane %v567, 1
  %v569 = vadd.f32 %v567, %v568
  %v570 = vsel %vm41, %v544, 0.0
  %v571 = vrot.slane %v570, 4
  %v572 = vadd.f32 %v570, %v571
  %v573 = vrot.slane %v572, 2
  %v574 = vadd.f32 %v572, %v573
  %v575 = vrot.slane %v574, 1
  %v576 = vadd.f32 %v574, %v575
  %v577 = vsel %vm41, %v545, 0.0
  %v578 = vrot.slane %v577, 4
  %v579 = vadd.f32 %v577, %v578
  %v580 = vrot.slane %v579, 2
  %v581 = vadd.f32 %v579, %v580
  %v582 = vrot.slane %v581, 1
  %v583 = vadd.f32 %v581, %v582
  %v584 = vsel %vm41, %v546, 0.0
  %v585 = vrot.slane %v584, 4
  %v586 = vadd.f32 %v584, %v585
  %v587 = vrot.slane %v586, 2
  %v588 = vadd.f32 %v586, %v587
  %v589 = vrot.slane %v588, 1
  %v590 = vadd.f32 %v588, %v589
  %v591 = vsel %vm41, %v547, 0.0
  %v592 = vrot.slane %v591, 4
  %v593 = vadd.f32 %v591, %v592
  %v594 = vrot.slane %v593, 2
  %v595 = vadd.f32 %v593, %v594
  %v596 = vrot.slane %v595, 1
  %v597 = vadd.f32 %v595, %v596
  %v598 = vsel %vm41, %v548, 0.0
  %v599 = vrot.slane %v598, 4
  %v600 = vadd.f32 %v598, %v599
  %v601 = vrot.slane %v600, 2
  %v602 = vadd.f32 %v600, %v601
  %v603 = vrot.slane %v602, 1
  %v604 = vadd.f32 %v602, %v603
  %v605 = vld [vmem:[%s3 + $0x40] sm:$0xff]
  %v606 = vld [vmem:[%s3 + $0xa8] sm:$0xff]
  %v607 = vld [vmem:[%s3 + $0x110] sm:$0xff]
  %v608 = vld [vmem:[%s3 + $0x178] sm:$0xff]
  %v609 = vld [vmem:[%s4 + $0x8] sm:$0x1]
  %v611 = vlaneseq
  %v612 = vshrl.u32 %v611, 7
  %v613 = vsub.s32 0, %v612
  %v614 = vrot.slane %v609, %v613
  %vm624 = vcmask 1041409
  %v625 = vsel %vm624, %v562, %v555
  %vm626 = vcmask 1042434
  %v627 = vsel %vm626, %v569, %v625
  %vm628 = vcmask 1043459
  %v629 = vsel %vm628, %v576, %v627
  %vm630 = vcmask 1044484
  %v631 = vsel %vm630, %v583, %v629
  %vm632 = vcmask 1045509
  %v633 = vsel %vm632, %v590, %v631
  %vm634 = vcmask 1046534
  %v635 = vsel %vm634, %v597, %v633
  %vm636 = vcmask 1047559
  %v637 = vsel %vm636, %v604, %v635
  %v638 = vsel %vm41, %v637, 0
  %640 = vmatprep.subr.mxu0 0.0
  %641 = vmatpush1.msra.mxu0 %v605
  %642 = vmatprep.subr.mxu0 0.0
  %643 = vmatpush1.msra.mxu0 %v606
  %644 = vmatprep.subr.mxu0 0.0
  %645 = vmatpush1.msra.mxu0 %v607
  %646 = vmatprep.subr.mxu0 0.0
  %647 = vmatpush1.msra.mxu0 %v608
  %648 = vmatprep.subr.mxu0 0.0
  %649 = vmatpush1.msra.mxu0 0.0
  %650 = vmatprep.subr.mxu0 0.0
  %651 = vmatpush1.msra.mxu0 0.0
  %652 = vmatprep.subr.mxu0 0.0
  %653 = vmatpush1.msra.mxu0 0.0
  %654 = vmatprep.subr.mxu0 0.0
  %655 = vmatpush1.msra.mxu0 0.0
  %656 = vmatprep.subr.mxu0 0.0
  %657 = vmatpush1.msra.mxu0 0.0
  %658 = vmatprep.subr.mxu0 0.0
  %659 = vmatpush1.msra.mxu0 0.0
  %660 = vmatprep.subr.mxu0 0.0
  %661 = vmatpush1.msra.mxu0 0.0
  %662 = vmatprep.subr.mxu0 0.0
  %663 = vmatpush1.msra.mxu0 0.0
  %664 = vmatprep.subr.mxu0 0.0
  %665 = vmatpush1.msra.mxu0 0.0
  %666 = vmatprep.subr.mxu0 0.0
  %667 = vmatpush1.msra.mxu0 0.0
  %668 = vmatprep.subr.mxu0 0.0
  %669 = vmatpush1.msra.mxu0 0.0
  %670 = vmatprep.subr.mxu0 0.0
  %671 = vmatpush1.msra.mxu0 0.0
  %672 = vmatprep.subr.mxu0 0.0
  %673 = vmatpush1.msra.mxu0 0.0
  %674 = vmatprep.subr.mxu0 0.0
  %675 = vmatpush1.msra.mxu0 0.0
  %676 = vmatprep.subr.mxu0 0.0
  %677 = vmatpush1.msra.mxu0 0.0
  %678 = vmatprep.subr.mxu0 0.0
  %679 = vmatpush1.msra.mxu0 0.0
  %680 = vmatprep.subr.mxu0 0.0
  %681 = vmatpush1.msra.mxu0 0.0
  %682 = vmatprep.subr.mxu0 0.0
  %683 = vmatpush1.msra.mxu0 0.0
  %684 = vmatprep.subr.mxu0 0.0
  %685 = vmatpush1.msra.mxu0 0.0
  %686 = vmatprep.subr.mxu0 0.0
  %687 = vmatpush1.msra.mxu0 0.0
  %688 = vmatprep.subr.mxu0 0.0
  %689 = vmatpush1.msra.mxu0 0.0
  %690 = vmatprep.subr.mxu0 0.0
  %691 = vmatpush1.msra.mxu0 0.0
  %692 = vmatprep.subr.mxu0 0.0
  %693 = vmatpush1.msra.mxu0 0.0
  %694 = vmatprep.subr.mxu0 0.0
  %695 = vmatpush1.msra.mxu0 0.0
  %696 = vmatprep.subr.mxu0 0.0
  %697 = vmatpush1.msra.mxu0 0.0
  %698 = vmatprep.subr.mxu0 0.0
  %699 = vmatpush1.msra.mxu0 0.0
  %700 = vmatprep.subr.mxu0 0.0
  %701 = vmatpush1.msra.mxu0 0.0
  %702 = vmatprep.subr.mxu0 0.0
  %703 = vmatpush1.msra.mxu0 0.0
  %704 = vmatprep.mubr.f32.mxu0 0.0
  %705 = vmatmul.mubr.f32.gmra.mrb[0].mxu0 %v638
  %v706 = vpop.f32.mrb[0].mxu0
  %v707 = vadd.f32 %v614, %v706
  %v708 = vpop.f32.mrb[0].mxu0
  %709 = vdwg.mxu0
  %v710 = vadd.f32 %v217, %v707
  %v711 = vmax.f32 %v710, 0.0
  %v712 = vld [vmem:[%s3 + $0x50] sm:$0xff]
  %v713 = vld [vmem:[%s3 + $0x58] sm:$0xff]
  %v714 = vld [vmem:[%s3 + $0x60] sm:$0xff]
  %v715 = vld [vmem:[%s3 + $0xb8] sm:$0xff]
  %v716 = vld [vmem:[%s3 + $0xc0] sm:$0xff]
  %v717 = vld [vmem:[%s3 + $0xc8] sm:$0xff]
  %v718 = vld [vmem:[%s3 + $0x120] sm:$0xff]
  %v719 = vld [vmem:[%s3 + $0x128] sm:$0xff]
  %v720 = vld [vmem:[%s3 + $0x130] sm:$0xff]
  %v721 = vld [vmem:[%s3 + $0x188] sm:$0xff]
  %v722 = vld [vmem:[%s3 + $0x190] sm:$0xff]
  %v723 = vld [vmem:[%s3 + $0x198] sm:$0xff]
  %v724 = vld [vmem:[%s4 + $0xa] sm:$0x7]
  %v726 = vlaneseq
  %v727 = vshrl.u32 %v726, 7
  %v728 = vsub.s32 0, %v727
  %v729 = vrot.slane %v724, %v728
  %v730 = vlaneseq
  %v731 = vshrl.u32 %v730, 7
  %v732 = vsub.s32 1, %v731
  %v733 = vrot.slane %v724, %v732
  %v734 = vlaneseq
  %v735 = vshrl.u32 %v734, 7
  %v736 = vsub.s32 2, %v735
  %v737 = vrot.slane %v724, %v736
  %v742 = vsel %vm41, %v711, 0
  %744 = vmatprep.subr.mxu0 %v713
  %745 = vmatpush1.msra.mxu0 %v712
  %746 = vmatprep.subr.mxu0 %v716
  %747 = vmatpush1.msra.mxu0 %v715
  %748 = vmatprep.subr.mxu0 %v719
  %749 = vmatpush1.msra.mxu0 %v718
  %750 = vmatprep.subr.mxu0 %v722
  %751 = vmatpush1.msra.mxu0 %v721
  %752 = vmatprep.subr.mxu0 0.0
  %753 = vmatpush1.msra.mxu0 0.0
  %754 = vmatprep.subr.mxu0 0.0
  %755 = vmatpush1.msra.mxu0 0.0
  %756 = vmatprep.subr.mxu0 0.0
  %757 = vmatpush1.msra.mxu0 0.0
  %758 = vmatprep.subr.mxu0 0.0
  %759 = vmatpush1.msra.mxu0 0.0
  %760 = vmatprep.subr.mxu0 0.0
  %761 = vmatpush1.msra.mxu0 0.0
  %762 = vmatprep.subr.mxu0 0.0
  %763 = vmatpush1.msra.mxu0 0.0
  %764 = vmatprep.subr.mxu0 0.0
  %765 = vmatpush1.msra.mxu0 0.0
  %766 = vmatprep.subr.mxu0 0.0
  %767 = vmatpush1.msra.mxu0 0.0
  %768 = vmatprep.subr.mxu0 0.0
  %769 = vmatpush1.msra.mxu0 0.0
  %770 = vmatprep.subr.mxu0 0.0
  %771 = vmatpush1.msra.mxu0 0.0
  %772 = vmatprep.subr.mxu0 0.0
  %773 = vmatpush1.msra.mxu0 0.0
  %774 = vmatprep.subr.mxu0 0.0
  %775 = vmatpush1.msra.mxu0 0.0
  %776 = vmatprep.subr.mxu0 0.0
  %777 = vmatpush1.msra.mxu0 0.0
  %778 = vmatprep.subr.mxu0 0.0
  %779 = vmatpush1.msra.mxu0 0.0
  %780 = vmatprep.subr.mxu0 0.0
  %781 = vmatpush1.msra.mxu0 0.0
  %782 = vmatprep.subr.mxu0 0.0
  %783 = vmatpush1.msra.mxu0 0.0
  %784 = vmatprep.subr.mxu0 0.0
  %785 = vmatpush1.msra.mxu0 0.0
  %786 = vmatprep.subr.mxu0 0.0
  %787 = vmatpush1.msra.mxu0 0.0
  %788 = vmatprep.subr.mxu0 0.0
  %789 = vmatpush1.msra.mxu0 0.0
  %790 = vmatprep.subr.mxu0 0.0
  %791 = vmatpush1.msra.mxu0 0.0
  %792 = vmatprep.subr.mxu0 0.0
  %793 = vmatpush1.msra.mxu0 0.0
  %794 = vmatprep.subr.mxu0 0.0
  %795 = vmatpush1.msra.mxu0 0.0
  %796 = vmatprep.subr.mxu0 0.0
  %797 = vmatpush1.msra.mxu0 0.0
  %798 = vmatprep.subr.mxu0 0.0
  %799 = vmatpush1.msra.mxu0 0.0
  %800 = vmatprep.subr.mxu0 0.0
  %801 = vmatpush1.msra.mxu0 0.0
  %802 = vmatprep.subr.mxu0 0.0
  %803 = vmatpush1.msra.mxu0 0.0
  %804 = vmatprep.subr.mxu0 0.0
  %805 = vmatpush1.msra.mxu0 0.0
  %806 = vmatprep.subr.mxu0 0.0
  %807 = vmatpush1.msra.mxu0 0.0
  %808 = vmatprep.mubr.f32.mxu0 0.0
  %809 = vmatmul.mubr.f32.gmra.mrb[0].mxu0 %v742
  %v810 = vpop.f32.mrb[0].mxu0
  %v811 = vadd.f32 %v729, %v810
  %v812 = vpop.f32.mrb[0].mxu0
  %v813 = vadd.f32 %v733, %v812
  %814 = vdwg.mxu0
  %815 = vmatprep.subr.mxu0 0.0
  %816 = vmatpush1.msra.mxu0 %v714
  %817 = vmatprep.subr.mxu0 0.0
  %818 = vmatpush1.msra.mxu0 %v717
  %819 = vmatprep.subr.mxu0 0.0
  %820 = vmatpush1.msra.mxu0 %v720
  %821 = vmatprep.subr.mxu0 0.0
  %822 = vmatpush1.msra.mxu0 %v723
  %823 = vmatprep.subr.mxu0 0.0
  %824 = vmatpush1.msra.mxu0 0.0
  %825 = vmatprep.subr.mxu0 0.0
  %826 = vmatpush1.msra.mxu0 0.0
  %827 = vmatprep.subr.mxu0 0.0
  %828 = vmatpush1.msra.mxu0 0.0
  %829 = vmatprep.subr.mxu0 0.0
  %830 = vmatpush1.msra.mxu0 0.0
  %831 = vmatprep.subr.mxu0 0.0
  %832 = vmatpush1.msra.mxu0 0.0
  %833 = vmatprep.subr.mxu0 0.0
  %834 = vmatpush1.msra.mxu0 0.0
  %835 = vmatprep.subr.mxu0 0.0
  %836 = vmatpush1.msra.mxu0 0.0
  %837 = vmatprep.subr.mxu0 0.0
  %838 = vmatpush1.msra.mxu0 0.0
  %839 = vmatprep.subr.mxu0 0.0
  %840 = vmatpush1.msra.mxu0 0.0
  %841 = vmatprep.subr.mxu0 0.0
  %842 = vmatpush1.msra.mxu0 0.0
  %843 = vmatprep.subr.mxu0 0.0
  %844 = vmatpush1.msra.mxu0 0.0
  %845 = vmatprep.subr.mxu0 0.0
  %846 = vmatpush1.msra.mxu0 0.0
  %847 = vmatprep.subr.mxu0 0.0
  %848 = vmatpush1.msra.mxu0 0.0
  %849 = vmatprep.subr.mxu0 0.0
  %850 = vmatpush1.msra.mxu0 0.0
  %851 = vmatprep.subr.mxu0 0.0
  %852 = vmatpush1.msra.mxu0 0.0
  %853 = vmatprep.subr.mxu0 0.0
  %854 = vmatpush1.msra.mxu0 0.0
  %855 = vmatprep.subr.mxu0 0.0
  %856 = vmatpush1.msra.mxu0 0.0
  %857 = vmatprep.subr.mxu0 0.0
  %858 = vmatpush1.msra.mxu0 0.0
  %859 = vmatprep.subr.mxu0 0.0
  %860 = vmatpush1.msra.mxu0 0.0
  %861 = vmatprep.subr.mxu0 0.0
  %862 = vmatpush1.msra.mxu0 0.0
  %863 = vmatprep.subr.mxu0 0.0
  %864 = vmatpush1.msra.mxu0 0.0
  %865 = vmatprep.subr.mxu0 0.0
  %866 = vmatpush1.msra.mxu0 0.0
  %867 = vmatprep.subr.mxu0 0.0
  %868 = vmatpush1.msra.mxu0 0.0
  %869 = vmatprep.subr.mxu0 0.0
  %870 = vmatpush1.msra.mxu0 0.0
  %871 = vmatprep.subr.mxu0 0.0
  %872 = vmatpush1.msra.mxu0 0.0
  %873 = vmatprep.subr.mxu0 0.0
  %874 = vmatpush1.msra.mxu0 0.0
  %875 = vmatprep.subr.mxu0 0.0
  %876 = vmatpush1.msra.mxu0 0.0
  %877 = vmatprep.subr.mxu0 0.0
  %878 = vmatpush1.msra.mxu0 0.0
  %879 = vmatprep.mubr.f32.mxu0 0.0
  %880 = vmatmul.mubr.f32.gmra.mrb[0].mxu0 %v742
  %v881 = vpop.f32.mrb[0].mxu0
  %v882 = vadd.f32 %v737, %v881
  %v883 = vpop.f32.mrb[0].mxu0
  %884 = vdwg.mxu0
  %v885 = vadd.f32 %v811, %v399
  %v886 = vxor.u32 %v885, 2147483648
  %v887 = vmul.f32 %v886, 1.442695
  %v888 = vpow.pop %v887
  %v889 = vadd.f32 %v888, 1.0
  %v890 = vrcp.pop %v889
  %v891 = vmul.f32 1.0, %v890
  %v892 = vadd.f32 %v813, %v468
  %v893 = vxor.u32 %v892, 2147483648
  %v894 = vmul.f32 %v893, 1.442695
  %v895 = vpow.pop %v894
  %v896 = vadd.f32 %v895, 1.0
  %v897 = vrcp.pop %v896
  %v898 = vmul.f32 1.0, %v897
  %v899 = vmul.f32 %v891, %v470
  %v900 = vadd.f32 %v882, %v899
  %v901 = vtanh.pop %v900
  %v902 = vsub.f32 1.0, %v898
  %v903 = vmul.f32 %v902, %v901
  %v904 = vmul.f32 %v898, %v21
  %v905 = vadd.f32 %v903, %v904
  %v906 = vld [vmem:[%s3 + $0x48] sm:$0xff]
  %v907 = vld [vmem:[%s3 + $0xb0] sm:$0xff]
  %v908 = vld [vmem:[%s3 + $0x118] sm:$0xff]
  %v909 = vld [vmem:[%s3 + $0x180] sm:$0xff]
  %v910 = vld [vmem:[%s4 + $0x9] sm:$0x1]
  %v912 = vlaneseq
  %v913 = vshrl.u32 %v912, 7
  %v914 = vsub.s32 0, %v913
  %v915 = vrot.slane %v910, %v914
  %v925 = vrot.slane %v22, 7
  %v926 = vrot.slane %v23, 6
  %v927 = vsel %vm624, %v926, %v925
  %v928 = vrot.slane %v24, 5
  %v929 = vsel %vm626, %v928, %v927
  %v930 = vrot.slane %v25, 4
  %v931 = vsel %vm628, %v930, %v929
  %v932 = vrot.slane %v26, 3
  %v933 = vsel %vm630, %v932, %v931
  %v934 = vrot.slane %v27, 2
  %v935 = vsel %vm632, %v934, %v933
  %v936 = vrot.slane %v28, 1
  %v937 = vsel %vm634, %v936, %v935
  %v938 = vsel %vm636, %v29, %v937
  %v939 = vsel %vm41, %v938, 0
  %941 = vmatprep.subr.mxu0 0.0
  %942 = vmatpush1.msra.mxu0 %v906
  %943 = vmatprep.subr.mxu0 0.0
  %944 = vmatpush1.msra.mxu0 %v907
  %945 = vmatprep.subr.mxu0 0.0
  %946 = vmatpush1.msra.mxu0 %v908
  %947 = vmatprep.subr.mxu0 0.0
  %948 = vmatpush1.msra.mxu0 %v909
  %949 = vmatprep.subr.mxu0 0.0
  %950 = vmatpush1.msra.mxu0 0.0
  %951 = vmatprep.subr.mxu0 0.0
  %952 = vmatpush1.msra.mxu0 0.0
  %953 = vmatprep.subr.mxu0 0.0
  %954 = vmatpush1.msra.mxu0 0.0
  %955 = vmatprep.subr.mxu0 0.0
  %956 = vmatpush1.msra.mxu0 0.0
  %957 = vmatprep.subr.mxu0 0.0
  %958 = vmatpush1.msra.mxu0 0.0
  %959 = vmatprep.subr.mxu0 0.0
  %960 = vmatpush1.msra.mxu0 0.0
  %961 = vmatprep.subr.mxu0 0.0
  %962 = vmatpush1.msra.mxu0 0.0
  %963 = vmatprep.subr.mxu0 0.0
  %964 = vmatpush1.msra.mxu0 0.0
  %965 = vmatprep.subr.mxu0 0.0
  %966 = vmatpush1.msra.mxu0 0.0
  %967 = vmatprep.subr.mxu0 0.0
  %968 = vmatpush1.msra.mxu0 0.0
  %969 = vmatprep.subr.mxu0 0.0
  %970 = vmatpush1.msra.mxu0 0.0
  %971 = vmatprep.subr.mxu0 0.0
  %972 = vmatpush1.msra.mxu0 0.0
  %973 = vmatprep.subr.mxu0 0.0
  %974 = vmatpush1.msra.mxu0 0.0
  %975 = vmatprep.subr.mxu0 0.0
  %976 = vmatpush1.msra.mxu0 0.0
  %977 = vmatprep.subr.mxu0 0.0
  %978 = vmatpush1.msra.mxu0 0.0
  %979 = vmatprep.subr.mxu0 0.0
  %980 = vmatpush1.msra.mxu0 0.0
  %981 = vmatprep.subr.mxu0 0.0
  %982 = vmatpush1.msra.mxu0 0.0
  %983 = vmatprep.subr.mxu0 0.0
  %984 = vmatpush1.msra.mxu0 0.0
  %985 = vmatprep.subr.mxu0 0.0
  %986 = vmatpush1.msra.mxu0 0.0
  %987 = vmatprep.subr.mxu0 0.0
  %988 = vmatpush1.msra.mxu0 0.0
  %989 = vmatprep.subr.mxu0 0.0
  %990 = vmatpush1.msra.mxu0 0.0
  %991 = vmatprep.subr.mxu0 0.0
  %992 = vmatpush1.msra.mxu0 0.0
  %993 = vmatprep.subr.mxu0 0.0
  %994 = vmatpush1.msra.mxu0 0.0
  %995 = vmatprep.subr.mxu0 0.0
  %996 = vmatpush1.msra.mxu0 0.0
  %997 = vmatprep.subr.mxu0 0.0
  %998 = vmatpush1.msra.mxu0 0.0
  %999 = vmatprep.subr.mxu0 0.0
  %1000 = vmatpush1.msra.mxu0 0.0
  %1001 = vmatprep.subr.mxu0 0.0
  %1002 = vmatpush1.msra.mxu0 0.0
  %1003 = vmatprep.subr.mxu0 0.0
  %1004 = vmatpush1.msra.mxu0 0.0
  %1005 = vmatprep.mubr.f32.mxu0 0.0
  %1006 = vmatmul.mubr.f32.gmra.mrb[0].mxu0 %v939
  %v1007 = vpop.f32.mrb[0].mxu0
  %v1008 = vadd.f32 %v915, %v1007
  %v1009 = vpop.f32.mrb[0].mxu0
  %1010 = vdwg.mxu0
  %v1011 = vadd.f32 %v286, %v1008
  %v1012 = vsel %vm41, %v1011, -inf
  %1013 = vmax.xlane.f32.xlu0 %v1012
  %v1014 = vpop.xlane.xlu0 %1013
  %v1015 = vsub.f32 %v1011, %v1014
  %v1016 = vmul.f32 %v1015, 1.442695
  %v1017 = vpow.pop %v1016
  %v1018 = vsel %vm41, %v1017, 0.0
  %1019 = vadd.xlane.f32.xlu0 %v1018
  %v1020 = vpop.xlane.xlu0 %1019
  %v1021 = vrcp.pop %v1020
  %v1022 = vmul.f32 %v1017, %v1021
  %v1023 = vmul.f32 %v905, %v1022
  %v1024 = vsel %vm41, %v1023, 0.0
  %1025 = vadd.xlane.f32.xlu0 %v1024
  %v1026 = vpop.xlane.xlu0 %1025
  %vm1027 = vcmask 7168
  %v1028 = vsel %vm1027, %v1026, 0.0
  %1029 = vst [vmem:[%s5] sm:$0xff] %v1028
  %v1030 = vsel %vm41, %v905, 0.0
  %1031 = vst [vmem:[%s5 + $0x8] sm:$0xff] %v1030
  %v1032 = vsel %vm473, %v484, 0.0
  %1033 = vst [vmem:[%s5 + $0x10] sm:$0xff] %v1032
  %v1034 = vsel %vm41, %v1022, 0.0
  %1035 = vst [vmem:[%s5 + $0x18] sm:$0xff] %v1034
  // Predicated region
  $region22: #{attn_decoder_forward.1} parent=0 // pred_check
    _
  $region23: #{attn_decoder_forward.1} parent=0 // pred_check_branch
    %1037 = sbr.rel (0) target = $region25
  $region24: #{attn_decoder_forward.1} parent=0 // pred_region
    _
  $region25: #{attn_decoder_forward.1} parent=0 // pred_fallthru
    _
  // Predicated region
  $region26: #{attn_decoder_forward.1} parent=0 // pred_check
    _
  $region27: #{attn_decoder_forward.1} parent=0 // pred_check_branch
    %1039 = sbr.rel (0) target = $region29
  $region28: #{attn_decoder_forward.1} parent=0 // pred_region
    _
  $region29: #{attn_decoder_forward.1} parent=0 // pred_fallthru
    _

</llo_original>
